<compile_context>
chip_gen: v5e
topology: v5e:2x2
jax: 0.10.0
libtpu: 0.0.40
codegen_flags: <defaults>
</compile_context>

<pallas_src>
import math

import jax
import jax.numpy as jnp
from jax.experimental import pallas as pl
from jax.experimental.pallas import tpu as pltpu

LANE = 128


def recognizer_head_kernel(x_ref, w_ref, b_ref, o_ref):
    # x_ref: (NB, M, C, TV)  batch tile (full M, C, flattened T*V)
    # w_ref: (C, KP)         classifier W^T, pre-scaled by 1/(M*T*V), K padded to 128
    # b_ref: (1, KP)         bias, zero-padded to 128 lanes
    # o_ref: (NB, KP)        lane-dense logits tile
    # AdaptiveAvgPool2d(1) + mean over persons M, fused into one f32 sum;
    # the 1/(M*T*V) scale lives in w_ref.
    pooled = jnp.sum(x_ref[...], axis=(1, 3), dtype=jnp.float32)   # (NB, C)
    logits = jnp.dot(pooled, w_ref[...],
                     preferred_element_type=jnp.float32)            # (NB, KP)
    o_ref[...] = (logits + b_ref[...]).astype(o_ref.dtype)


def recognizer_forward(x, w, b):
    """x: (N, M, C, T, V) backbone output; w: (K, C) PyTorch-layout Linear
    weight; b: (K,) bias. Returns logits (N, K) in float32."""
    N, M, C, T, V = x.shape
    K = w.shape[0]
    tv = T * V
    KP = max(LANE, pl.cdiv(K, LANE) * LANE)

    # Fold the pooling scale 1/(M*T*V) into the (transposed) classifier weight.
    scale = 1.0 / float(M * tv)
    w_t = jnp.transpose(w).astype(jnp.float32) * scale              # (C, K)
    w_t = jnp.pad(w_t, ((0, 0), (0, KP - K)))                       # (C, KP)
    b_row = jnp.pad(b.astype(jnp.float32).reshape(1, K),
                    ((0, 0), (0, KP - K)))                          # (1, KP)

    # Batch-tile sizing: keep the double-buffered x tile under ~24 MiB so it
    # fits the default scoped VMEM on every TPU generation.
    row_bytes = M * C * tv * x.dtype.itemsize
    budget = 12 * 1024 * 1024                                       # per buffer
    if N * row_bytes <= budget:
        NB = N                                                      # single grid step
    else:
        NB = max(8, (int(budget // row_bytes) // 8) * 8)            # multiple of 8
    Np = pl.cdiv(N, NB) * NB

    x_flat = x.reshape(N, M, C, tv)
    if Np != N:
        x_flat = jnp.pad(x_flat, ((0, Np - N), (0, 0), (0, 0), (0, 0)))

    # Conservative VMEM request: 2x-buffered x tile + (tiny) w/b/out blocks.
    vmem_needed = (2 * NB * row_bytes + 2 * C * KP * 4 + 2 * KP * 4
                   + 2 * NB * KP * 4 + (2 << 20))
    vmem_limit = int(min(max(vmem_needed, 32 << 20), 64 << 20))

    out = pl.pallas_call(
        recognizer_head_kernel,
        out_shape=jax.ShapeDtypeStruct((Np, KP), jnp.float32),
        grid_spec=pltpu.PrefetchScalarGridSpec(
            num_scalar_prefetch=0,
            grid=(Np // NB,),
            in_specs=[
                pl.BlockSpec((NB, M, C, tv), lambda n: (n, 0, 0, 0)),
                pl.BlockSpec((C, KP), lambda n: (0, 0)),   # invariant: fetched once
                pl.BlockSpec((1, KP), lambda n: (0, 0)),   # invariant: fetched once
            ],
            out_specs=pl.BlockSpec((NB, KP), lambda n: (n, 0)),
        ),
        compiler_params=pltpu.CompilerParams(
            dimension_semantics=("parallel",),
            vmem_limit_bytes=vmem_limit),
    )(x_flat, w_t, b_row)

    return out[:N, :K]


if __name__ == "__main__":
    # Small shapes consistent with the forward:
    # N batch, M persons, C backbone channels, T frames, V joints, K classes.
    N, M, C, T, V = 2, 2, 32, 8, 16
    K = 10

    key = jax.random.PRNGKey(0)
    kx, kw = jax.random.split(key)

    # Synthetic backbone output (stands in for STGCN(x)).
    x = jax.random.normal(kx, (N, M, C, T, V), dtype=jnp.float32)

    # Classify.init_weights: xavier_uniform_ on weight, zero bias.
    bound = math.sqrt(6.0 / (C + K))
    w = jax.random.uniform(kw, (K, C), minval=-bound, maxval=bound,
                           dtype=jnp.float32)
    b = jnp.zeros((K,), dtype=jnp.float32)

    out = recognizer_forward(x, w, b)
    out = jax.block_until_ready(out)

    # Pure-JAX reference for the same forward semantics.
    ref = x.mean(axis=(3, 4)).mean(axis=1) @ w.T + b
    assert out.shape == (N, K)
    assert jnp.allclose(out, ref, atol=1e-4, rtol=1e-4)

    print("KERNEL_OK")
</pallas_src>

<mosaic_0001>
module attributes {stable_mosaic.version = 11 : i64} {
  func.func @recognizer_head_kernel(%arg0: i32, %arg1: memref<2x2x32x128xf32, #tpu.memory_space<vmem>>, %arg2: memref<32x128xf32, #tpu.memory_space<vmem>>, %arg3: memref<1x128xf32, #tpu.memory_space<vmem>>, %arg4: memref<2x128xf32, #tpu.memory_space<vmem>>) attributes {dimension_semantics = [#tpu.dimension_semantics<parallel>], iteration_bounds = array<i64: 1>, scalar_prefetch = 0 : i64, scratch_operands = 0 : i64, tpu.core_type = #tpu.core_type<tc>, window_params = [{transform_indices = @transform_0, window_bounds = array<i64: 2, 2, 32, 128>}, {pipeline_mode = #tpu.pipeline_mode<synchronous>, transform_indices = @transform_1, window_bounds = array<i64: 32, 128>}, {pipeline_mode = #tpu.pipeline_mode<synchronous>, transform_indices = @transform_2, window_bounds = array<i64: 1, 128>}, {transform_indices = @transform_3, window_bounds = array<i64: 2, 128>}]} {
    %c0 = arith.constant 0 : index
    %c0_0 = arith.constant 0 : index
    %c0_1 = arith.constant 0 : index
    %c0_2 = arith.constant 0 : index
    %0 = vector.load %arg1[%c0, %c0_0, %c0_1, %c0_2] : memref<2x2x32x128xf32, #tpu.memory_space<vmem>>, vector<2x2x32x128xf32>
    %cst = arith.constant dense<0.000000e+00> : vector<2x32xf32>
    %1 = vector.multi_reduction <add>, %0, %cst [1, 3] : vector<2x2x32x128xf32> to vector<2x32xf32>
    %c0_3 = arith.constant 0 : index
    %c0_4 = arith.constant 0 : index
    %2 = vector.load %arg2[%c0_3, %c0_4] : memref<32x128xf32, #tpu.memory_space<vmem>>, vector<32x128xf32>
    %cst_5 = arith.constant dense<0.000000e+00> : vector<2x128xf32>
    %3 = tpu.matmul %1, %2, %cst_5 {dimension_numbers = #tpu.dot_dimension_numbers<[1], [0], [0], [1], [0, 0, 1, 1], [], []>} : vector<2x32xf32>, vector<32x128xf32>, vector<2x128xf32> -> vector<2x128xf32>
    %c0_6 = arith.constant 0 : index
    %c0_7 = arith.constant 0 : index
    %4 = vector.load %arg3[%c0_6, %c0_7] : memref<1x128xf32, #tpu.memory_space<vmem>>, vector<1x128xf32>
    %5 = vector.broadcast %4 : vector<1x128xf32> to vector<2x128xf32>
    %6 = arith.addf %3, %5 : vector<2x128xf32>
    %c0_8 = arith.constant 0 : index
    %c0_9 = arith.constant 0 : index
    %7 = vector.load %arg4[%c0_8, %c0_9] : memref<2x128xf32, #tpu.memory_space<vmem>>, vector<2x128xf32>
    tpu.vector_store %arg4[%c0_8, %c0_9], %6 {strides = array<i32>} : memref<2x128xf32, #tpu.memory_space<vmem>>, vector<2x128xf32>,
    return
  }
  func.func @transform_0(%arg0: i32) -> (i32, i32, i32, i32) {
    %c0_i32 = arith.constant 0 : i32
    %c0_i32_0 = arith.constant 0 : i32
    %c0_i32_1 = arith.constant 0 : i32
    %c0_i32_2 = arith.constant 0 : i32
    return %arg0, %c0_i32, %c0_i32_0, %c0_i32_1 : i32, i32, i32, i32
  }
  func.func @transform_1(%arg0: i32) -> (i32, i32) {
    %c0_i32 = arith.constant 0 : i32
    %c0_i32_0 = arith.constant 0 : i32
    %c0_i32_1 = arith.constant 0 : i32
    return %c0_i32, %c0_i32_0 : i32, i32
  }
  func.func @transform_2(%arg0: i32) -> (i32, i32) {
    %c0_i32 = arith.constant 0 : i32
    %c0_i32_0 = arith.constant 0 : i32
    %c0_i32_1 = arith.constant 0 : i32
    return %c0_i32, %c0_i32_0 : i32, i32
  }
  func.func @transform_3(%arg0: i32) -> (i32, i32) {
    %c0_i32 = arith.constant 0 : i32
    %c0_i32_0 = arith.constant 0 : i32
    return %arg0, %c0_i32 : i32, i32
  }
}

</mosaic_0001>

<llo_original>
// kernel: tpu_custom_call.1
$region0: #{tpu_custom_call.1}
  #allocation0 [shape = 'u32[]', space=smem, size = 0x4, offset = 0x4, fixed_abs, tag = 'smem constant byte address 0x4 - core index']
  #allocation1 [shape = 'u32[72,128]{1,0:T(1,128)}', space=vmem, size = 0x9000, scoped, tag = 'internal scratch']
  %s0 = inlined_call_operand.hbm [shape: f32[2,2,32,128], index: 0, kind: input, shape index: {}]
  %s1 = inlined_call_operand.hbm [shape: f32[32,128], index: 1, kind: input, shape index: {}]
  %s2 = inlined_call_operand.vmem [shape: f32[1,128], index: 2, kind: input, shape index: {}]
  %s3 = inlined_call_operand.hbm [shape: f32[2,128], index: 3, kind: output, shape index: {}]
  %s4 = sld [smem:[#allocation0]]
  $region30: #{tpu_custom_call.1} parent=0
    _
  %s6 = ssub.s32 1, %s4
  %s7 = scalar_select 0, %s6, %s4
  $region1: #{tpu_custom_call.1} parent=0
    #allocation2 [shape = 'u8[65536]{0}', space=vmem, size = 0x10000, scoped, tag = 'input window, operand 0, single buffered']
    #allocation3 [shape = 's32[1]{0}', space=sflag, size = 0x4, scoped, tag = 'scoped memory for tpu_custom_call.1']
    #allocation4 [shape = 's32[1]{0}', space=sflag, size = 0x4, scoped, tag = 'scoped memory for tpu_custom_call.1']
    #allocation5 [shape = 'u8[16384]{0}', space=vmem, size = 0x4000, scoped, tag = 'input window, operand 1, single buffered']
    #allocation6 [shape = 's32[1]{0}', space=sflag, size = 0x4, scoped, tag = 'scoped memory for tpu_custom_call.1']
    #allocation7 [shape = 'u8[1024]{0}', space=vmem, size = 0x400, scoped, tag = 'output window, operand 0, single buffered']
    %8 = vsyncpa [#allocation3], 0
    %9 = vsyncpa [#allocation6], 0
    %10 = vsyncpa [#allocation4], 0
    // Predicated region
    $region2: #{tpu_custom_call.1} parent=1 // pred_check
      _
    $region3: #{tpu_custom_call.1} parent=1 // pred_check_branch
      %12 = sbr.rel (0) target = $region5
    $region4: #{tpu_custom_call.1} parent=1 // pred_region
      %14 = vsyncadd [#allocation3], 0
      %s15 = sshll.u32 %s0, 4
      %s16 = int_to_ptr.hbm [resolvable:$true] %s15
      %s17 = sshll.u32 [#allocation2], 4
      %s18 = int_to_ptr.vmem [resolvable:$true] %s17
      %23 = dma.hbm_to_vmem [thread:$0]  %s16, 2048, %s18, [#allocation3], 128, 128, 8
    $region5: #{tpu_custom_call.1} parent=1 // pred_fallthru
      _
    // Predicated region
    $region6: #{tpu_custom_call.1} parent=1 // pred_check
      _
    $region7: #{tpu_custom_call.1} parent=1 // pred_check_branch
      %25 = sbr.rel (0) target = $region9
    $region8: #{tpu_custom_call.1} parent=1 // pred_region
      %27 = vsyncadd [#allocation6], 0
      %s28 = sshll.u32 %s1, 4
      %s29 = int_to_ptr.hbm [resolvable:$true] %s28
      %s30 = sshll.u32 [#allocation5], 4
      %s31 = int_to_ptr.vmem [resolvable:$true] %s30
      %36 = dma.hbm_to_vmem [thread:$0]  %s29, 512, %s31, [#allocation6], 128, 128, 8
    $region9: #{tpu_custom_call.1} parent=1 // pred_fallthru
      _
    // Predicated region
    $region10: #{tpu_custom_call.1} parent=1 // pred_check
      _
    $region11: #{tpu_custom_call.1} parent=1 // pred_check_branch
      %38 = sbr.rel (0) target = $region13
    $region12: #{tpu_custom_call.1} parent=1 // pred_region
      _
    $region13: #{tpu_custom_call.1} parent=1 // pred_fallthru
      _
    // Predicated region
    $region14: #{tpu_custom_call.1} parent=1 // pred_check
      _
    $region15: #{tpu_custom_call.1} parent=1 // pred_check_branch
      %40 = sbr.rel (0) target = $region17
    $region16: #{tpu_custom_call.1} parent=1 // pred_region
      %42 = dma.done [#allocation3], 2048
    $region17: #{tpu_custom_call.1} parent=1 // pred_fallthru
      _
    // Predicated region
    $region18: #{tpu_custom_call.1} parent=1 // pred_check
      _
    $region19: #{tpu_custom_call.1} parent=1 // pred_check_branch
      %44 = sbr.rel (0) target = $region21
    $region20: #{tpu_custom_call.1} parent=1 // pred_region
      %46 = dma.done [#allocation6], 512
    $region21: #{tpu_custom_call.1} parent=1 // pred_fallthru
      _
    %v47 = vld [vmem:[#allocation2] sm:$0xff]
    %v48 = vld [vmem:[#allocation2 + $0x8] sm:$0xff]
    %v49 = vld [vmem:[#allocation2 + $0x10] sm:$0xff]
    %v50 = vld [vmem:[#allocation2 + $0x18] sm:$0xff]
    %v51 = vld [vmem:[#allocation2 + $0x20] sm:$0xff]
    %v52 = vld [vmem:[#allocation2 + $0x28] sm:$0xff]
    %v53 = vld [vmem:[#allocation2 + $0x30] sm:$0xff]
    %v54 = vld [vmem:[#allocation2 + $0x38] sm:$0xff]
    %v55 = vld [vmem:[#allocation2 + $0x40] sm:$0xff]
    %v56 = vld [vmem:[#allocation2 + $0x48] sm:$0xff]
    %v57 = vld [vmem:[#allocation2 + $0x50] sm:$0xff]
    %v58 = vld [vmem:[#allocation2 + $0x58] sm:$0xff]
    %v59 = vld [vmem:[#allocation2 + $0x60] sm:$0xff]
    %v60 = vld [vmem:[#allocation2 + $0x68] sm:$0xff]
    %v61 = vld [vmem:[#allocation2 + $0x70] sm:$0xff]
    %v62 = vld [vmem:[#allocation2 + $0x78] sm:$0xff]
    %v63 = vadd.f32 %v47, %v51
    %64 = vadd.xlane.f32.xlu0 %v63
    %v65 = vpop.xlane.xlu0 %64
    %v66 = vadd.f32 %v48, %v52
    %67 = vadd.xlane.f32.xlu0 %v66
    %v68 = vpop.xlane.xlu0 %67
    %v69 = vadd.f32 %v49, %v53
    %70 = vadd.xlane.f32.xlu0 %v69
    %v71 = vpop.xlane.xlu0 %70
    %v72 = vadd.f32 %v50, %v54
    %73 = vadd.xlane.f32.xlu0 %v72
    %v74 = vpop.xlane.xlu0 %73
    %v75 = vadd.f32 %v55, %v59
    %76 = vadd.xlane.f32.xlu0 %v75
    %v77 = vpop.xlane.xlu0 %76
    %v78 = vadd.f32 %v56, %v60
    %79 = vadd.xlane.f32.xlu0 %v78
    %v80 = vpop.xlane.xlu0 %79
    %v81 = vadd.f32 %v57, %v61
    %82 = vadd.xlane.f32.xlu0 %v81
    %v83 = vpop.xlane.xlu0 %82
    %v84 = vadd.f32 %v58, %v62
    %85 = vadd.xlane.f32.xlu0 %v84
    %v86 = vpop.xlane.xlu0 %85
    %v87 = vld [vmem:[#allocation5] sm:$0xff]
    %v88 = vld [vmem:[#allocation5 + $0x8] sm:$0xff]
    %v89 = vld [vmem:[#allocation5 + $0x10] sm:$0xff]
    %v90 = vld [vmem:[#allocation5 + $0x18] sm:$0xff]
    %v91 = vld [vmem:[%s2] sm:$0x1]
    %v93 = vperm.slane %v91, 0
    %v103 = vlaneseq
    %v104 = vand.u32 %v103, 127
    %v105 = vperm.slane %v65, %v104
    %v106 = vadd.s32 %v104, 4294967288
    %v107 = vperm.slane %v68, %v106
    %vm108 = vcmask 130112
    %v109 = vsel %vm108, %v107, %v105
    %v110 = vadd.s32 %v104, 4294967280
    %v111 = vperm.slane %v71, %v110
    %vm112 = vcmask 195712
    %v113 = vsel %vm112, %v111, %v109
    %v114 = vadd.s32 %v104, 4294967272
    %v115 = vperm.slane %v74, %v114
    %vm116 = vcmask 261312
    %v117 = vsel %vm116, %v115, %v113
    %v118 = vperm.slane %v77, %v104
    %v119 = vperm.slane %v80, %v106
    %v120 = vsel %vm108, %v119, %v118
    %v121 = vperm.slane %v83, %v110
    %v122 = vsel %vm112, %v121, %v120
    %v123 = vperm.slane %v86, %v114
    %v124 = vsel %vm116, %v123, %v122
    %vm125 = vcmask 1041409
    %v126 = vsel %vm125, %v124, %v117
    %vm127 = vcmask 261120
    %v128 = vsel %vm127, %v126, 0
    %130 = vmatpush.msra.mxu0 0.0
    %131 = vmatpush.msra.mxu0 0.0
    %132 = vmatpush.msra.mxu0 0.0
    %133 = vmatpush.msra.mxu0 0.0
    %134 = vmatpush.msra.mxu0 0.0
    %135 = vmatpush.msra.mxu0 0.0
    %136 = vmatpush.msra.mxu0 0.0
    %137 = vmatpush.msra.mxu0 0.0
    %138 = vmatpush.msra.mxu0 0.0
    %139 = vmatpush.msra.mxu0 0.0
    %140 = vmatpush.msra.mxu0 0.0
    %141 = vmatpush.msra.mxu0 0.0
    %142 = vmatpush.msra.mxu0 %v90
    %143 = vmatpush.msra.mxu0 %v89
    %144 = vmatpush.msra.mxu0 %v88
    %145 = vmatpush.msra.mxu0 %v87
    %146 = vmatmul.f32.gmra.mxu0 %v128
    %v147 = vpop.f32.mrf.mxu0
    %v148 = vadd.f32 %v93, %v147
    %149 = vdwg.mxu0
    %150 = vst [vmem:[#allocation7] sm:$0x3] %v148
    // Predicated region
    $region22: #{tpu_custom_call.1} parent=1 // pred_check
      _
    $region23: #{tpu_custom_call.1} parent=1 // pred_check_branch
      %152 = sbr.rel (0) target = $region25
    $region24: #{tpu_custom_call.1} parent=1 // pred_region
      %154 = vsyncadd [#allocation4], 0
      %s156 = sshll.u32 [#allocation7], 4
      %s157 = int_to_ptr.vmem [resolvable:$true] %s156
      %s158 = sshll.u32 %s3, 4
      %s159 = int_to_ptr.hbm [resolvable:$true] %s158
      %161 = dma.vmem_to_hbm [thread:$0]  %s157, 32, %s159, [#allocation4]
    $region25: #{tpu_custom_call.1} parent=1 // pred_fallthru
      _
    // Predicated region
    $region26: #{tpu_custom_call.1} parent=1 // pred_check
      _
    $region27: #{tpu_custom_call.1} parent=1 // pred_check_branch
      %163 = sbr.rel (0) target = $region29
    $region28: #{tpu_custom_call.1} parent=1 // pred_region
      %165 = dma.done [#allocation4], 32
    $region29: #{tpu_custom_call.1} parent=1 // pred_fallthru
      _
    %166 = vsyncpa [#allocation3], 1
    %167 = vsyncpa [#allocation6], 1
    %168 = vsyncpa [#allocation4], 1

</llo_original>
